<compile_context>
chip_gen: v6e
topology: v6e:2x2x1
jax: 0.10.0
libtpu: 0.0.40
codegen_flags: <defaults>
</compile_context>

<pallas_src>
import jax
import jax.numpy as jnp
from jax.experimental import pallas as pl
from jax.experimental.pallas import tpu as pltpu

HIDDEN_SIZE = 128
INPUT_SIZE = 256
NUM_CLASSES = 1
DROPOUT_P = 0.3
# keep an element iff uniform u32 bits >= p * 2^32 (integer-domain compare:
# no u32->f32 convert or extra mask multiply on the vector path).
_DROPOUT_THRESHOLD = int(DROPOUT_P * (1 << 32))
_DROPOUT_SCALE = 1.0 / (1.0 - DROPOUT_P)


def _mlp_body(x, w1_ref, b1_ref, w2_ref, b2_ref, o_ref):
    # fc1 + ReLU on the MXU (f32 accumulate).
    h = jnp.dot(x, w1_ref[...], preferred_element_type=jnp.float32) + b1_ref[...]
    h = jnp.maximum(h, 0.0)
    # fc2 has a single output column: a systolic matmul would use <1% of the
    # MXU and still pay the push/pop latency, so do it as a VPU multiply +
    # lane reduction. w2_ref is (1, HIDDEN_SIZE) and broadcasts over rows.
    out = jnp.sum(h * w2_ref[...], axis=-1, keepdims=True) + b2_ref[...]
    o_ref[...] = jnp.tanh(out)


def _mlp_kernel_eval(x_ref, w1_ref, b1_ref, w2_ref, b2_ref, o_ref):
    # eval-mode dropout is identity.
    _mlp_body(x_ref[...], w1_ref, b1_ref, w2_ref, b2_ref, o_ref)


def _mlp_kernel_train(bits_ref, x_ref, w1_ref, b1_ref, w2_ref, b2_ref, o_ref):
    # nn.Dropout(p=0.3) training semantics: zero with prob p, scale by 1/(1-p).
    # Uniform u32 bits are generated host-side (jax.random.bits) and tiled along
    # the batch exactly like x, so every grid tile gets an independent mask.
    # TODO(synk): switch to in-kernel pltpu.prng_seed/prng_random_bits (saves the
    # extra HBM bits stream) once the runner no longer uses CPU interpret mode,
    # where those primitives have no lowering.
    keep = bits_ref[...] >= jnp.uint32(_DROPOUT_THRESHOLD)
    x = jnp.where(keep, x_ref[...] * _DROPOUT_SCALE, 0.0)
    _mlp_body(x, w1_ref, b1_ref, w2_ref, b2_ref, o_ref)


def mlp_forward(x, w1, b1, w2, b2, *, training=False, rng_key=None, tile_b=1024):
    """Pallas-TPU forward for Net: dropout -> fc1 -> relu -> fc2 -> tanh.

    The batch is tiled into a 1-D grid so BlockSpec double-buffers the x (and
    dropout-bits) stream, overlapping the DMA of tile i+1 with compute of tile
    i, and VMEM stays bounded as B grows (important on v7x's 64 MiB VMEM).
    The grid axis is marked "parallel" so v7x's two TensorCores share the batch.
    Weights/biases use constant index_maps and stay VMEM-resident.
    """
    B = x.shape[0]
    tile_b = min(tile_b, B)
    if B % tile_b != 0:
        tile_b = B  # ragged batch fallback: one block (keeps correctness)
    grid = (B // tile_b,)

    x_spec = pl.BlockSpec((tile_b, INPUT_SIZE), lambda i: (i, 0))
    out_spec = pl.BlockSpec((tile_b, NUM_CLASSES), lambda i: (i, 0))
    # Constant index_maps -> fetched once, VMEM-resident across all batch tiles.
    w_specs = [
        pl.BlockSpec((INPUT_SIZE, HIDDEN_SIZE), lambda i: (0, 0)),
        pl.BlockSpec((1, HIDDEN_SIZE), lambda i: (0, 0)),
        pl.BlockSpec((NUM_CLASSES, HIDDEN_SIZE), lambda i: (0, 0)),
        pl.BlockSpec((1, NUM_CLASSES), lambda i: (0, 0)),
    ]

    flops = 2 * B * INPUT_SIZE * HIDDEN_SIZE + 2 * B * HIDDEN_SIZE * NUM_CLASSES
    param_bytes = 4 * (w1.size + b1.size + w2.size + b2.size)
    io_bytes = 4 * (x.size + B * NUM_CLASSES) + param_bytes

    compiler_params = pltpu.CompilerParams(
        dimension_semantics=("parallel",))  # megacore sharding on v7x, free elsewhere

    if training:
        if rng_key is None:
            rng_key = jax.random.PRNGKey(0)
        bits = jax.random.bits(rng_key, x.shape, dtype=jnp.uint32)
        bits_spec = pl.BlockSpec((tile_b, INPUT_SIZE), lambda i: (i, 0))
        cost = pl.CostEstimate(flops=flops,
                               transcendentals=B * NUM_CLASSES,
                               bytes_accessed=io_bytes + 4 * x.size)
        return pl.pallas_call(
            _mlp_kernel_train,
            out_shape=jax.ShapeDtypeStruct((B, NUM_CLASSES), jnp.float32),
            grid=grid,
            in_specs=[bits_spec, x_spec] + w_specs,
            out_specs=out_spec,
            compiler_params=compiler_params,
            cost_estimate=cost,
        )(bits, x, w1, b1, w2, b2)

    cost = pl.CostEstimate(flops=flops,
                           transcendentals=B * NUM_CLASSES,
                           bytes_accessed=io_bytes)
    return pl.pallas_call(
        _mlp_kernel_eval,
        out_shape=jax.ShapeDtypeStruct((B, NUM_CLASSES), jnp.float32),
        grid=grid,
        in_specs=[x_spec] + w_specs,
        out_specs=out_spec,
        compiler_params=compiler_params,
        cost_estimate=cost,
    )(x, w1, b1, w2, b2)


def init_params(key):
    """Deterministic PyTorch-style init: U(-1/sqrt(fan_in), 1/sqrt(fan_in))."""
    k1, k2, k3, k4 = jax.random.split(key, 4)
    bound1 = 1.0 / (INPUT_SIZE ** 0.5)
    bound2 = 1.0 / (HIDDEN_SIZE ** 0.5)
    w1 = jax.random.uniform(k1, (INPUT_SIZE, HIDDEN_SIZE), jnp.float32,
                            -bound1, bound1)
    b1 = jax.random.uniform(k2, (1, HIDDEN_SIZE), jnp.float32, -bound1, bound1)
    # fc2 weight kept in PyTorch layout (NUM_CLASSES, HIDDEN_SIZE).
    w2 = jax.random.uniform(k3, (NUM_CLASSES, HIDDEN_SIZE), jnp.float32,
                            -bound2, bound2)
    b2 = jax.random.uniform(k4, (1, NUM_CLASSES), jnp.float32, -bound2, bound2)
    return w1, b1, w2, b2


if __name__ == "__main__":
    key = jax.random.PRNGKey(0)
    k_x, k_p, k_drop = jax.random.split(key, 3)

    B = 16       # small batch
    TILE_B = 8   # exercises a real 2-step batched grid
    x = jax.random.normal(k_x, (B, INPUT_SIZE), dtype=jnp.float32)
    w1, b1, w2, b2 = init_params(k_p)

    # --- Eval mode (dropout = identity), matching module.eval() semantics. ---
    out = jax.block_until_ready(
        mlp_forward(x, w1, b1, w2, b2, training=False, tile_b=TILE_B))
    h_ref = jnp.maximum(x @ w1 + b1, 0.0)
    ref = jnp.tanh(jnp.sum(h_ref * w2, axis=-1, keepdims=True) + b2)
    assert out.shape == (B, NUM_CLASSES)
    # tolerance accounts for possible bf16 MXU passes on real TPU for the fc1 dot
    assert jnp.allclose(out, ref, atol=1e-3, rtol=1e-3), \
        float(jnp.max(jnp.abs(out - ref)))

    # --- Training mode (in-kernel dropout apply, host-generated uniform bits). ---
    out_train = jax.block_until_ready(
        mlp_forward(x, w1, b1, w2, b2, training=True, rng_key=k_drop,
                    tile_b=TILE_B))
    bits = jax.random.bits(k_drop, x.shape, dtype=jnp.uint32)
    keep = bits >= jnp.uint32(_DROPOUT_THRESHOLD)
    xd = jnp.where(keep, x * _DROPOUT_SCALE, 0.0)
    h_t = jnp.maximum(xd @ w1 + b1, 0.0)
    ref_t = jnp.tanh(jnp.sum(h_t * w2, axis=-1, keepdims=True) + b2)
    assert out_train.shape == (B, NUM_CLASSES)
    assert jnp.allclose(out_train, ref_t, atol=1e-3, rtol=1e-3), \
        float(jnp.max(jnp.abs(out_train - ref_t)))

    print("KERNEL_OK")
</pallas_src>

<mosaic_0001>
module attributes {stable_mosaic.version = 11 : i64} {
  func.func @_mlp_kernel_eval(%arg0: i32, %arg1: memref<8x256xf32, #tpu.memory_space<vmem>>, %arg2: memref<256x128xf32, #tpu.memory_space<vmem>>, %arg3: memref<1x128xf32, #tpu.memory_space<vmem>>, %arg4: memref<1x128xf32, #tpu.memory_space<vmem>>, %arg5: memref<1x1xf32, #tpu.memory_space<vmem>>, %arg6: memref<8x1xf32, #tpu.memory_space<vmem>>) attributes {dimension_semantics = [#tpu.dimension_semantics<parallel>], iteration_bounds = array<i64: 2>, scalar_prefetch = 0 : i64, scratch_operands = 0 : i64, tpu.core_type = #tpu.core_type<tc>, window_params = [{transform_indices = @transform_0, window_bounds = array<i64: 8, 256>}, {pipeline_mode = #tpu.pipeline_mode<synchronous>, transform_indices = @transform_1, window_bounds = array<i64: 256, 128>}, {pipeline_mode = #tpu.pipeline_mode<synchronous>, transform_indices = @transform_2, window_bounds = array<i64: 1, 128>}, {pipeline_mode = #tpu.pipeline_mode<synchronous>, transform_indices = @transform_3, window_bounds = array<i64: 1, 128>}, {pipeline_mode = #tpu.pipeline_mode<synchronous>, transform_indices = @transform_4, window_bounds = array<i64: 1, 1>}, {transform_indices = @transform_5, window_bounds = array<i64: 8, 1>}]} {
    %c0 = arith.constant 0 : index
    %c0_0 = arith.constant 0 : index
    %0 = vector.load %arg1[%c0, %c0_0] : memref<8x256xf32, #tpu.memory_space<vmem>>, vector<8x256xf32>
    %c0_1 = arith.constant 0 : index
    %c0_2 = arith.constant 0 : index
    %1 = vector.load %arg2[%c0_1, %c0_2] : memref<256x128xf32, #tpu.memory_space<vmem>>, vector<256x128xf32>
    %cst = arith.constant dense<0.000000e+00> : vector<8x128xf32>
    %2 = tpu.matmul %0, %1, %cst {dimension_numbers = #tpu.dot_dimension_numbers<[1], [0], [0], [1], [0, 0, 1, 1], [], []>} : vector<8x256xf32>, vector<256x128xf32>, vector<8x128xf32> -> vector<8x128xf32>
    %c0_3 = arith.constant 0 : index
    %c0_4 = arith.constant 0 : index
    %3 = vector.load %arg3[%c0_3, %c0_4] : memref<1x128xf32, #tpu.memory_space<vmem>>, vector<1x128xf32>
    %4 = vector.broadcast %3 : vector<1x128xf32> to vector<8x128xf32>
    %5 = arith.addf %2, %4 : vector<8x128xf32>
    %cst_5 = arith.constant 0.000000e+00 : f32
    %6 = vector.broadcast %cst_5 : f32 to vector<8x128xf32>
    %7 = arith.maximumf %5, %6 : vector<8x128xf32>
    %c0_6 = arith.constant 0 : index
    %c0_7 = arith.constant 0 : index
    %8 = vector.load %arg4[%c0_6, %c0_7] : memref<1x128xf32, #tpu.memory_space<vmem>>, vector<1x128xf32>
    %9 = vector.broadcast %8 : vector<1x128xf32> to vector<8x128xf32>
    %10 = arith.mulf %7, %9 : vector<8x128xf32>
    %cst_8 = arith.constant dense<0.000000e+00> : vector<8xf32>
    %11 = vector.multi_reduction <add>, %10, %cst_8 [1] : vector<8x128xf32> to vector<8xf32>
    %12 = vector.shape_cast %11 : vector<8xf32> to vector<8x1xf32>
    %c0_9 = arith.constant 0 : index
    %c0_10 = arith.constant 0 : index
    %13 = vector.load %arg5[%c0_9, %c0_10] : memref<1x1xf32, #tpu.memory_space<vmem>>, vector<1x1xf32>
    %14 = vector.broadcast %13 : vector<1x1xf32> to vector<8x1xf32>
    %15 = arith.addf %12, %14 : vector<8x1xf32>
    %16 = math.tanh %15 : vector<8x1xf32>
    %c0_11 = arith.constant 0 : index
    %c0_12 = arith.constant 0 : index
    %17 = vector.load %arg6[%c0_11, %c0_12] : memref<8x1xf32, #tpu.memory_space<vmem>>, vector<8x1xf32>
    tpu.vector_store %arg6[%c0_11, %c0_12], %16 {strides = array<i32>} : memref<8x1xf32, #tpu.memory_space<vmem>>, vector<8x1xf32>,
    return
  }
  func.func @transform_0(%arg0: i32) -> (i32, i32) {
    %c0_i32 = arith.constant 0 : i32
    %c0_i32_0 = arith.constant 0 : i32
    return %arg0, %c0_i32 : i32, i32
  }
  func.func @transform_1(%arg0: i32) -> (i32, i32) {
    %c0_i32 = arith.constant 0 : i32
    %c0_i32_0 = arith.constant 0 : i32
    %c0_i32_1 = arith.constant 0 : i32
    return %c0_i32, %c0_i32_0 : i32, i32
  }
  func.func @transform_2(%arg0: i32) -> (i32, i32) {
    %c0_i32 = arith.constant 0 : i32
    %c0_i32_0 = arith.constant 0 : i32
    %c0_i32_1 = arith.constant 0 : i32
    return %c0_i32, %c0_i32_0 : i32, i32
  }
  func.func @transform_3(%arg0: i32) -> (i32, i32) {
    %c0_i32 = arith.constant 0 : i32
    %c0_i32_0 = arith.constant 0 : i32
    %c0_i32_1 = arith.constant 0 : i32
    return %c0_i32, %c0_i32_0 : i32, i32
  }
  func.func @transform_4(%arg0: i32) -> (i32, i32) {
    %c0_i32 = arith.constant 0 : i32
    %c0_i32_0 = arith.constant 0 : i32
    %c0_i32_1 = arith.constant 0 : i32
    return %c0_i32, %c0_i32_0 : i32, i32
  }
  func.func @transform_5(%arg0: i32) -> (i32, i32) {
    %c0_i32 = arith.constant 0 : i32
    %c0_i32_0 = arith.constant 0 : i32
    return %arg0, %c0_i32 : i32, i32
  }
}

</mosaic_0001>

<llo_original>
// kernel: tpu_custom_call.1
$region0: #{tpu_custom_call.1}
  #allocation0 [shape = 'u32[]', space=smem, size = 0x4, offset = 0x4, fixed_abs, tag = 'smem constant byte address 0x4 - core index']
  #allocation1 [shape = 'u32[144,128]{1,0:T(1,128)}', space=vmem, size = 0x12000, scoped, tag = 'internal scratch']
  #allocation2 [shape = 'f32[1,1]{1,0:T(1,128)S(1)}', space=vmem, size = 0x200, scoped, tag = 'scoped memory for tpu_custom_call.1']
  %s0 = inlined_call_operand.hbm [shape: f32[16,256], index: 0, kind: input, shape index: {}]
  %s1 = inlined_call_operand.hbm [shape: f32[256,128], index: 1, kind: input, shape index: {}]
  %s2 = inlined_call_operand.vmem [shape: f32[1,128], index: 2, kind: input, shape index: {}]
  %s3 = inlined_call_operand.vmem [shape: f32[1,128], index: 3, kind: input, shape index: {}]
  %s4 = inlined_call_operand.<no memory space> [shape: f32[1,1], index: 4, kind: input, shape index: {}]
  %s5 = inlined_call_operand.vmem [shape: f32[16,1], index: 5, kind: output, shape index: {}]
  %s6 = sld [smem:[#allocation0]]
  $region61: #{tpu_custom_call.1} parent=0
    _
  %s8 = ssub.s32 1, %s6
  %s9 = scalar_select 0, %s8, %s6
  %v10 = vstv %s4
  %11 = vst [vmem:[#allocation2] sm:$0x1] %v10
  $region1: #{tpu_custom_call.1} parent=0
    #allocation3 [shape = 'u8[16384]{0}', space=vmem, size = 0x4000, scoped, tag = 'input window, operand 0']
    #allocation4 [shape = 's32[2]{0}', space=sflag, size = 0x8, scoped, tag = 'scoped memory for tpu_custom_call.1']
    #allocation5 [shape = 'u8[131072]{0}', space=vmem, size = 0x20000, scoped, tag = 'input window, operand 1, single buffered']
    #allocation6 [shape = 's32[1]{0}', space=sflag, size = 0x4, scoped, tag = 'scoped memory for tpu_custom_call.1']
    %12 = vsyncpa [#allocation4], 0
    %s13 = scalar_lea.sflag [#allocation4], 1
    %14 = vsyncpa %s13, 0
    %15 = vsyncpa [#allocation6], 0
    loop: start=0, step=1, limit=4
    $region2: #{tpu_custom_call.1} parent=1 // loop_pre_header
      _
    $region3: #{tpu_custom_call.1} parent=1 // loop_header
      %s17 = sphi 0, %s21
      %p18 = scmp.ge.s32.totalorder %s17, 4
      %s27 = sphi 0, %s29
      %s30 = sphi 0, %s27
      %s31 = sphi 0, %s30
      %s47 = sphi 0, %s31
      %s51 = sphi 0, %s51
      %s53 = sphi 0, %s51
      %s54 = sphi 0, %s53
      %s68 = sphi 0, %s54
      %s72 = sphi 0, %s72
      %s74 = sphi 0, %s72
      %s75 = sphi 0, %s74
      %s89 = sphi 0, %s75
      %s93 = sphi 0, %s93
      %s95 = sphi 0, %s93
      %s96 = sphi 0, %s95
      %s110 = sphi 0, %s96
      %s114 = sphi 0, %s114
      %s116 = sphi 0, %s114
      %s117 = sphi 0, %s116
      %s131 = sphi 0, %s117
      %s137 = sphi 0, %s139
      %s140 = sphi 0, %s137
      %s141 = sphi 0, %s140
      %s157 = sphi 0, %s141
    $region4: #{tpu_custom_call.1} parent=1 // loop_header_branch
      %20 = sbr.rel (%p18) target = $region8
    $region5: #{tpu_custom_call.1} parent=1 // loop_body
      %s22 = ssub.s32 %s17, 1
      %s23 = ssub.s32 %s17, 2
      %s24 = sadd.s32 %s17, 1
      %s25 = ssub.s32 %s17, %s24
      %p26 = scmp.eq.s32.totalorder %s25, 0
      %s28 = sadd.s32 %s27, 1
      %s29 = scalar_select %p26, %s27, %s28
      %p32 = pneg %p26
      %p33 = scmp.eq.s32.totalorder %s17, 1
      %p34 = por %p32, %p33
      %p35 = scmp.ne.s32.totalorder %s27, %s30
      %p36 = scmp.eq.s32.totalorder %s17, 0
      %p37 = por %p35, %p36
      %p38 = scmp.ne.s32.totalorder %s27, %s30
      %p39 = scmp.eq.s32.totalorder %s22, 1
      %p40 = por %p38, %p39
      %p41 = scmp.ne.s32.totalorder %s30, %s31
      %p42 = scmp.eq.s32.totalorder %s22, 0
      %p43 = por %p41, %p42
      %p44 = scmp.ne.s32.totalorder %s30, %s31
      %p45 = scmp.eq.s32.totalorder %s23, 1
      %p46 = por %p44, %p45
      %p48 = scmp.ne.s32.totalorder %s31, %s47
      %p49 = scmp.eq.s32.totalorder %s23, 0
      %p50 = por %p48, %p49
      %s52 = sadd.s32 %s51, 1
      %p55 = scmp.eq.s32.totalorder %s17, 1
      %p56 = scmp.ne.s32.totalorder %s51, %s53
      %p57 = scmp.eq.s32.totalorder %s17, 0
      %p58 = por %p56, %p57
      %p59 = scmp.ne.s32.totalorder %s51, %s53
      %p60 = scmp.eq.s32.totalorder %s22, 1
      %p61 = por %p59, %p60
      %p62 = scmp.ne.s32.totalorder %s53, %s54
      %p63 = scmp.eq.s32.totalorder %s22, 0
      %p64 = por %p62, %p63
      %p65 = scmp.ne.s32.totalorder %s53, %s54
      %p66 = scmp.eq.s32.totalorder %s23, 1
      %p67 = por %p65, %p66
      %p69 = scmp.ne.s32.totalorder %s54, %s68
      %p70 = scmp.eq.s32.totalorder %s23, 0
      %p71 = por %p69, %p70
      %s73 = sadd.s32 %s72, 1
      %p76 = scmp.eq.s32.totalorder %s17, 1
      %p77 = scmp.ne.s32.totalorder %s72, %s74
      %p78 = scmp.eq.s32.totalorder %s17, 0
      %p79 = por %p77, %p78
      %p80 = scmp.ne.s32.totalorder %s72, %s74
      %p81 = scmp.eq.s32.totalorder %s22, 1
      %p82 = por %p80, %p81
      %p83 = scmp.ne.s32.totalorder %s74, %s75
      %p84 = scmp.eq.s32.totalorder %s22, 0
      %p85 = por %p83, %p84
      %p86 = scmp.ne.s32.totalorder %s74, %s75
      %p87 = scmp.eq.s32.totalorder %s23, 1
      %p88 = por %p86, %p87
      %p90 = scmp.ne.s32.totalorder %s75, %s89
      %p91 = scmp.eq.s32.totalorder %s23, 0
      %p92 = por %p90, %p91
      %s94 = sadd.s32 %s93, 1
      %p97 = scmp.eq.s32.totalorder %s17, 1
      %p98 = scmp.ne.s32.totalorder %s93, %s95
      %p99 = scmp.eq.s32.totalorder %s17, 0
      %p100 = por %p98, %p99
      %p101 = scmp.ne.s32.totalorder %s93, %s95
      %p102 = scmp.eq.s32.totalorder %s22, 1
      %p103 = por %p101, %p102
      %p104 = scmp.ne.s32.totalorder %s95, %s96
      %p105 = scmp.eq.s32.totalorder %s22, 0
      %p106 = por %p104, %p105
      %p107 = scmp.ne.s32.totalorder %s95, %s96
      %p108 = scmp.eq.s32.totalorder %s23, 1
      %p109 = por %p107, %p108
      %p111 = scmp.ne.s32.totalorder %s96, %s110
      %p112 = scmp.eq.s32.totalorder %s23, 0
      %p113 = por %p111, %p112
      %s115 = sadd.s32 %s114, 1
      %p118 = scmp.eq.s32.totalorder %s17, 1
      %p119 = scmp.ne.s32.totalorder %s114, %s116
      %p120 = scmp.eq.s32.totalorder %s17, 0
      %p121 = por %p119, %p120
      %p122 = scmp.ne.s32.totalorder %s114, %s116
      %p123 = scmp.eq.s32.totalorder %s22, 1
      %p124 = por %p122, %p123
      %p125 = scmp.ne.s32.totalorder %s116, %s117
      %p126 = scmp.eq.s32.totalorder %s22, 0
      %p127 = por %p125, %p126
      %p128 = scmp.ne.s32.totalorder %s116, %s117
      %p129 = scmp.eq.s32.totalorder %s23, 1
      %p130 = por %p128, %p129
      %p132 = scmp.ne.s32.totalorder %s117, %s131
      %p133 = scmp.eq.s32.totalorder %s23, 0
      %p134 = por %p132, %p133
      %s135 = ssub.s32 %s17, %s24
      %p136 = scmp.eq.s32.totalorder %s135, 0
      %s138 = sadd.s32 %s137, 1
      %s139 = scalar_select %p136, %s137, %s138
      %p142 = pneg %p136
      %p143 = scmp.eq.s32.totalorder %s17, 1
      %p144 = por %p142, %p143
      %p145 = scmp.ne.s32.totalorder %s137, %s140
      %p146 = scmp.eq.s32.totalorder %s17, 0
      %p147 = por %p145, %p146
      %p148 = scmp.ne.s32.totalorder %s137, %s140
      %p149 = scmp.eq.s32.totalorder %s22, 1
      %p150 = por %p148, %p149
      %p151 = scmp.ne.s32.totalorder %s140, %s141
      %p152 = scmp.eq.s32.totalorder %s22, 0
      %p153 = por %p151, %p152
      %p154 = scmp.ne.s32.totalorder %s140, %s141
      %p155 = scmp.eq.s32.totalorder %s23, 1
      %p156 = por %p154, %p155
      %p158 = scmp.ne.s32.totalorder %s141, %s157
      %p159 = scmp.eq.s32.totalorder %s23, 0
      %p160 = por %p158, %p159
      %p161 = scmp.le.s32.totalorder 1, %s17
      %p162 = scmp.lt.s32.totalorder %s17, 3
      %p163 = pnand %p161, %p162
      %p164 = pneg %p163
      // Predicated region
      $region9: #{tpu_custom_call.1} parent=5 // pred_check
        _
      $region10: #{tpu_custom_call.1} parent=5 // pred_check_branch
        %166 = sbr.rel (%p163) target = $region12
      $region11: #{tpu_custom_call.1} parent=5 // pred_region
        %s167 = ssub.s32 %s17, 1
        // Predicated region
        $region13: #{tpu_custom_call.1} parent=11 // pred_check
          %p168 = pneg %p64
        $region14: #{tpu_custom_call.1} parent=11 // pred_check_branch
          %170 = sbr.rel (%p168) target = $region16
        $region15: #{tpu_custom_call.1} parent=11 // pred_region
          %s172 = ssub.s32 4096, 4096
          %173 = vsyncadd [#allocation6], %s172
          %s174 = sshll.u32 [#allocation5], 4
          %s175 = int_to_ptr.vmem [resolvable:$true] %s174
          %180 = dma.hbm_to_vmem [thread:$0]  %s1, 4096, %s175, [#allocation6], 128, 128, 8
        $region16: #{tpu_custom_call.1} parent=11 // pred_fallthru
          _
        // Predicated region
        $region17: #{tpu_custom_call.1} parent=11 // pred_check
          %p181 = pneg %p85
        $region18: #{tpu_custom_call.1} parent=11 // pred_check_branch
          %183 = sbr.rel (%p181) target = $region20
        $region19: #{tpu_custom_call.1} parent=11 // pred_region
          _
        $region20: #{tpu_custom_call.1} parent=11 // pred_fallthru
          _
        // Predicated region
        $region21: #{tpu_custom_call.1} parent=11 // pred_check
          %p184 = pneg %p106
        $region22: #{tpu_custom_call.1} parent=11 // pred_check_branch
          %186 = sbr.rel (%p184) target = $region24
        $region23: #{tpu_custom_call.1} parent=11 // pred_region
          _
        $region24: #{tpu_custom_call.1} parent=11 // pred_fallthru
          _
        // Predicated region
        $region25: #{tpu_custom_call.1} parent=11 // pred_check
          %p187 = pneg %p127
        $region26: #{tpu_custom_call.1} parent=11 // pred_check_branch
          %189 = sbr.rel (%p187) target = $region28
        $region27: #{tpu_custom_call.1} parent=11 // pred_region
          _
        $region28: #{tpu_custom_call.1} parent=11 // pred_fallthru
          _
      $region12: #{tpu_custom_call.1} parent=5 // pred_fallthru
        _
      %p190 = scmp.lt.s32.totalorder %s17, 2
      // Predicated region
      $region29: #{tpu_custom_call.1} parent=5 // pred_check
        %p191 = pneg %p190
      $region30: #{tpu_custom_call.1} parent=5 // pred_check_branch
        %193 = sbr.rel (%p191) target = $region32
      $region31: #{tpu_custom_call.1} parent=5 // pred_region
        // Predicated region
        $region33: #{tpu_custom_call.1} parent=31 // pred_check
          %p194 = pneg %p37
        $region34: #{tpu_custom_call.1} parent=31 // pred_check_branch
          %196 = sbr.rel (%p194) target = $region36
        $region35: #{tpu_custom_call.1} parent=31 // pred_region
          %s197 = sand.u32 %s27, 1
          %s198 = scalar_lea.sflag [#allocation4], %s197
          %s199 = sand.u32 %s27, 1
          %s200 = smul.addr %s199, 16
          %s201 = scalar_lea.vmem [#allocation3], %s200
          %s203 = ssub.s32 256, 256
          %204 = vsyncadd %s198, %s203
          %s205 = smul.addr %s17, 2
          %s206 = smul.addr %s205, 128
          %s207 = scalar_lea.hbm %s0, %s206
          %s209 = sshll.u32 %s201, 4
          %s210 = int_to_ptr.vmem [resolvable:$true] %s209
          %212 = dma.hbm_to_vmem [thread:$0]  %s207, 256, %s210, %s198
        $region36: #{tpu_custom_call.1} parent=31 // pred_fallthru
          _
      $region32: #{tpu_custom_call.1} parent=5 // pred_fallthru
        _
      %p213 = scmp.le.s32.totalorder 1, %s17
      %p214 = scmp.lt.s32.totalorder %s17, 3
      %p215 = pnand %p213, %p214
      %p216 = pneg %p215
      // Predicated region
      $region37: #{tpu_custom_call.1} parent=5 // pred_check
        _
      $region38: #{tpu_custom_call.1} parent=5 // pred_check_branch
        %218 = sbr.rel (%p215) target = $region40
      $region39: #{tpu_custom_call.1} parent=5 // pred_region
        %s219 = ssub.s32 %s17, 1
        %s220 = sand.u32 %s30, 1
        %s221 = scalar_lea.sflag [#allocation4], %s220
        %s222 = sand.u32 %s30, 1
        %s223 = smul.addr %s222, 16
        %s224 = scalar_lea.vmem [#allocation3], %s223
        // Predicated region
        $region41: #{tpu_custom_call.1} parent=39 // pred_check
          %p225 = pneg %p43
        $region42: #{tpu_custom_call.1} parent=39 // pred_check_branch
          %227 = sbr.rel (%p225) target = $region44
        $region43: #{tpu_custom_call.1} parent=39 // pred_region
          %228 = dma.done %s221, 256
        $region44: #{tpu_custom_call.1} parent=39 // pred_fallthru
          _
        // Predicated region
        $region45: #{tpu_custom_call.1} parent=39 // pred_check
          %p229 = pneg %p64
        $region46: #{tpu_custom_call.1} parent=39 // pred_check_branch
          %231 = sbr.rel (%p229) target = $region48
        $region47: #{tpu_custom_call.1} parent=39 // pred_region
          %232 = dma.done [#allocation6], 4096
        $region48: #{tpu_custom_call.1} parent=39 // pred_fallthru
          _
        %s233 = sand.u32 %s30, 1
        %s234 = scalar_lea.sflag [#allocation4], %s233
        %s235 = sand.u32 %s30, 1
        %s236 = smul.addr %s235, 16
        %s237 = scalar_lea.vmem [#allocation3], %s236
        %p238 = pneg %p43
        %p239 = pneg %p40
        %p240 = pneg %p64
        %p241 = pneg %p61
        %p242 = pneg %p85
        %p243 = pneg %p82
        %p244 = pneg %p106
        %p245 = pneg %p103
        %p246 = pneg %p127
        %p247 = pneg %p124
        %p248 = pneg %p153
        %p249 = pneg %p150
        %p250 = scmp.lt.s32.totalorder %s22, 1
        %s251 = scalar_select %p250, %s22, 1
        %s252 = smul.addr %s251, 8
        %s253 = scalar_lea.vmem %s5, %s252
        %p254 = scmp.lt.s32.totalorder %s22, 1
        %s255 = scalar_select %p254, %s22, 1
        %s256 = smul.addr %s255, 8
        %s257 = scalar_lea.vmem %s5, %s256
        %v258 = vld [vmem:[%s224] sm:$0xff]
        %v259 = vld [vmem:[%s224 + $0x8] sm:$0xff]
        %v260 = vld [vmem:[#allocation5] sm:$0xff]
        %v261 = vld [vmem:[#allocation5 + $0x8] sm:$0xff]
        %v262 = vld [vmem:[#allocation5 + $0x10] sm:$0xff]
        %v263 = vld [vmem:[#allocation5 + $0x18] sm:$0xff]
        %v264 = vld [vmem:[#allocation5 + $0x20] sm:$0xff]
        %v265 = vld [vmem:[#allocation5 + $0x28] sm:$0xff]
        %v266 = vld [vmem:[#allocation5 + $0x30] sm:$0xff]
        %v267 = vld [vmem:[#allocation5 + $0x38] sm:$0xff]
        %v268 = vld [vmem:[#allocation5 + $0x40] sm:$0xff]
        %v269 = vld [vmem:[#allocation5 + $0x48] sm:$0xff]
        %v270 = vld [vmem:[#allocation5 + $0x50] sm:$0xff]
        %v271 = vld [vmem:[#allocation5 + $0x58] sm:$0xff]
        %v272 = vld [vmem:[#allocation5 + $0x60] sm:$0xff]
        %v273 = vld [vmem:[#allocation5 + $0x68] sm:$0xff]
        %v274 = vld [vmem:[#allocation5 + $0x70] sm:$0xff]
        %v275 = vld [vmem:[#allocation5 + $0x78] sm:$0xff]
        %v276 = vld [vmem:[#allocation5 + $0x80] sm:$0xff]
        %v277 = vld [vmem:[#allocation5 + $0x88] sm:$0xff]
        %v278 = vld [vmem:[#allocation5 + $0x90] sm:$0xff]
        %v279 = vld [vmem:[#allocation5 + $0x98] sm:$0xff]
        %v280 = vld [vmem:[#allocation5 + $0xa0] sm:$0xff]
        %v281 = vld [vmem:[#allocation5 + $0xa8] sm:$0xff]
        %v282 = vld [vmem:[#allocation5 + $0xb0] sm:$0xff]
        %v283 = vld [vmem:[#allocation5 + $0xb8] sm:$0xff]
        %v284 = vld [vmem:[#allocation5 + $0xc0] sm:$0xff]
        %v285 = vld [vmem:[#allocation5 + $0xc8] sm:$0xff]
        %v286 = vld [vmem:[#allocation5 + $0xd0] sm:$0xff]
        %v287 = vld [vmem:[#allocation5 + $0xd8] sm:$0xff]
        %v288 = vld [vmem:[#allocation5 + $0xe0] sm:$0xff]
        %v289 = vld [vmem:[#allocation5 + $0xe8] sm:$0xff]
        %v290 = vld [vmem:[#allocation5 + $0xf0] sm:$0xff]
        %v291 = vld [vmem:[#allocation5 + $0xf8] sm:$0xff]
        %v292 = vld [vmem:[%s2] sm:$0x1]
        %v294 = vlaneseq
        %v295 = vshrl.u32 %v294, 7
        %v296 = vsub.s32 0, %v295
        %v297 = vrot.slane %v292, %v296
        %299 = vmatprep.subr.mxu0 0.0
        %300 = vmatpush1.msra.mxu0 %v275
        %301 = vmatprep.subr.mxu0 0.0
        %302 = vmatpush1.msra.mxu0 %v274
        %303 = vmatprep.subr.mxu0 0.0
        %304 = vmatpush1.msra.mxu0 %v273
        %305 = vmatprep.subr.mxu0 0.0
        %306 = vmatpush1.msra.mxu0 %v272
        %307 = vmatprep.subr.mxu0 0.0
        %308 = vmatpush1.msra.mxu0 %v271
        %309 = vmatprep.subr.mxu0 0.0
        %310 = vmatpush1.msra.mxu0 %v270
        %311 = vmatprep.subr.mxu0 0.0
        %312 = vmatpush1.msra.mxu0 %v269
        %313 = vmatprep.subr.mxu0 0.0
        %314 = vmatpush1.msra.mxu0 %v268
        %315 = vmatprep.subr.mxu0 0.0
        %316 = vmatpush1.msra.mxu0 %v267
        %317 = vmatprep.subr.mxu0 0.0
        %318 = vmatpush1.msra.mxu0 %v266
        %319 = vmatprep.subr.mxu0 0.0
        %320 = vmatpush1.msra.mxu0 %v265
        %321 = vmatprep.subr.mxu0 0.0
        %322 = vmatpush1.msra.mxu0 %v264
        %323 = vmatprep.subr.mxu0 0.0
        %324 = vmatpush1.msra.mxu0 %v263
        %325 = vmatprep.subr.mxu0 0.0
        %326 = vmatpush1.msra.mxu0 %v262
        %327 = vmatprep.subr.mxu0 0.0
        %328 = vmatpush1.msra.mxu0 %v261
        %329 = vmatprep.subr.mxu0 0.0
        %330 = vmatpush1.msra.mxu0 %v260
        %331 = vmatprep.subr.mxu0 0.0
        %332 = vmatpush2.msra.mxu0 %v291
        %333 = vmatprep.subr.mxu0 0.0
        %334 = vmatpush2.msra.mxu0 %v290
        %335 = vmatprep.subr.mxu0 0.0
        %336 = vmatpush2.msra.mxu0 %v289
        %337 = vmatprep.subr.mxu0 0.0
        %338 = vmatpush2.msra.mxu0 %v288
        %339 = vmatprep.subr.mxu0 0.0
        %340 = vmatpush2.msra.mxu0 %v287
        %341 = vmatprep.subr.mxu0 0.0
        %342 = vmatpush2.msra.mxu0 %v286
        %343 = vmatprep.subr.mxu0 0.0
        %344 = vmatpush2.msra.mxu0 %v285
        %345 = vmatprep.subr.mxu0 0.0
        %346 = vmatpush2.msra.mxu0 %v284
        %347 = vmatprep.subr.mxu0 0.0
        %348 = vmatpush2.msra.mxu0 %v283
        %349 = vmatprep.subr.mxu0 0.0
        %350 = vmatpush2.msra.mxu0 %v282
        %351 = vmatprep.subr.mxu0 0.0
        %352 = vmatpush2.msra.mxu0 %v281
        %353 = vmatprep.subr.mxu0 0.0
        %354 = vmatpush2.msra.mxu0 %v280
        %355 = vmatprep.subr.mxu0 0.0
        %356 = vmatpush2.msra.mxu0 %v279
        %357 = vmatprep.subr.mxu0 0.0
        %358 = vmatpush2.msra.mxu0 %v278
        %359 = vmatprep.subr.mxu0 0.0
        %360 = vmatpush2.msra.mxu0 %v277
        %361 = vmatprep.subr.mxu0 0.0
        %362 = vmatpush2.msra.mxu0 %v276
        %363 = vmatprep.mubr.f32.mxu0 %v259
        %364 = vmatmul.mubr.f32.gmra.mxu0 %v258
        %v365 = vpop.f32.mrf.mxu0
        %v366 = vadd.f32 %v297, %v365
        %v367 = vpop.f32.mrf.mxu0
        %368 = vdwg.mxu0
        %v369 = vmax.f32 %v366, 0.0
        %v370 = vld [vmem:[%s3] sm:$0x1]
        %v372 = vlaneseq
        %v373 = vshrl.u32 %v372, 7
        %v374 = vsub.s32 0, %v373
        %v375 = vrot.slane %v370, %v374
        %v377 = vmul.f32 %v369, %v375
        %378 = vadd.xlane.f32.xlu0 %v377
        %v379 = vpop.xlane.xlu0 %378
        %v380 = vld [vmem:[#allocation2] sm:$0x1]
        %v382 = vlaneseq
        %v383 = vshrl.u32 %v382, 7
        %v384 = vsub.s32 0, %v383
        %v385 = vrot.slane %v380, %v384
        %v387 = vadd.f32 %v379, %v385
        %v388 = vtanh.pop %v387
        %vm389 = vcmask 7168
        %390 = vst.msk [vmem:[%s257] sm:$0xff] %vm389, %v388
        %p391 = scmp.lt.s32.totalorder %s22, 1
        %s392 = scalar_select %p391, %s22, 1
        %s393 = smul.addr %s392, 8
        %s394 = scalar_lea.vmem %s5, %s393
        // Predicated region
        $region49: #{tpu_custom_call.1} parent=39 // pred_check
          %p395 = pneg %p150
        $region50: #{tpu_custom_call.1} parent=39 // pred_check_branch
          %397 = sbr.rel (%p395) target = $region52
        $region51: #{tpu_custom_call.1} parent=39 // pred_region
          _
        $region52: #{tpu_custom_call.1} parent=39 // pred_fallthru
          _
      $region40: #{tpu_custom_call.1} parent=5 // pred_fallthru
        _
      %p398 = scmp.le.s32.totalorder 2, %s17
      // Predicated region
      $region53: #{tpu_custom_call.1} parent=5 // pred_check
        %p399 = pneg %p398
      $region54: #{tpu_custom_call.1} parent=5 // pred_check_branch
        %401 = sbr.rel (%p399) target = $region56
      $region55: #{tpu_custom_call.1} parent=5 // pred_region
        %s402 = ssub.s32 %s17, 2
        // Predicated region
        $region57: #{tpu_custom_call.1} parent=55 // pred_check
          %p403 = pneg %p156
        $region58: #{tpu_custom_call.1} parent=55 // pred_check_branch
          %405 = sbr.rel (%p403) target = $region60
        $region59: #{tpu_custom_call.1} parent=55 // pred_region
          %p406 = scmp.lt.s32.totalorder %s23, 1
          %s407 = scalar_select %p406, %s23, 1
          %s408 = smul.addr %s407, 8
          %s409 = scalar_lea.vmem %s5, %s408
        $region60: #{tpu_custom_call.1} parent=55 // pred_fallthru
          _
      $region56: #{tpu_custom_call.1} parent=5 // pred_fallthru
        _
    $region6: #{tpu_custom_call.1} parent=1 // loop_footer
      %s21 = sadd.s32 1, %s17
    $region7: #{tpu_custom_call.1} parent=1 // loop_footer_branch
      %16 = sbr.rel target = $region3
    $region8: #{tpu_custom_call.1} parent=1 // loop_exit
      _
    %410 = vsyncpa [#allocation4], 1
    %s411 = scalar_lea.sflag [#allocation4], 1
    %412 = vsyncpa %s411, 1
    %413 = vsyncpa [#allocation6], 1

</llo_original>
